<compile_context>
chip_gen: v7x
topology: tpu7x:2x2x1
jax: 0.10.0
libtpu: 0.0.40
codegen_flags: <defaults>
</compile_context>

<pallas_src>
import math
import numpy as np
import jax
import jax.numpy as jnp
from jax.experimental import pallas as pl
from jax.experimental.pallas import tpu as pltpu

HIGHEST = jax.lax.Precision.HIGHEST


# --------------------------------------------------------------------------
# Kernel 1: backbone 1x1 stride-2 conv (+ReLU) + hypernet-generated 1x1 conv.
#   layout: channels-first, flattened spatial in the lane dim.
#   x block    : (1, Cin, TS)
#   pred block : (1, D,   TS)
# --------------------------------------------------------------------------
def _make_stage1_kernel(prec):
    def kernel(wb_ref, wfd_ref, x_ref, pred_ref):
        xc = x_ref[0]                                            # (Cin, TS), compute dtype
        # Backbone 1x1 conv on the MXU.  K = Cin is tiny, but stage 1 is DMA-bound, and this
        # keeps VALU / the store slot free (no big f32 intermediate, no vreg spills).
        feat = jnp.dot(wb_ref[...], xc,
                       preferred_element_type=jnp.float32, precision=prec)   # (F, TS) f32
        feat = jnp.maximum(feat, 0.0).astype(xc.dtype)           # ReLU, back to compute dtype
        # Hypernet-generated 1x1 conv: (D, F) @ (F, TS) -> (D, TS), f32 accumulation.
        pred = jnp.dot(wfd_ref[...], feat,
                       preferred_element_type=jnp.float32, precision=prec)
        pred_ref[0] = pred.astype(pred_ref.dtype)
    return kernel


# --------------------------------------------------------------------------
# Kernel 2: separable bilinear upsample (align_corners=True), TD planes per step.
#   pred block : (TD*Hs, Ws)   (plane-major rows; free wrapper reshape of (N, D, Hs, Ws))
#   width      : (TD*Hs, Ws) @ A_w^T (Ws, W) -> (TD*Hs, W)   one big MXU matmul
#   height     : per plane, A_h (H, Hs) @ (Hs, W) -> (H, W)  short unrolled loop
# --------------------------------------------------------------------------
def _make_stage2_kernel(td, hs, prec):
    def kernel(awT_ref, ah_ref, p_ref, o_ref):
        tw = jnp.dot(p_ref[...], awT_ref[...],
                     preferred_element_type=jnp.float32, precision=prec)     # (TD*Hs, W) f32
        ah = ah_ref[...]
        cdt = ah.dtype
        for t in range(td):                                      # static unroll, td is small
            plane = tw[t * hs:(t + 1) * hs, :].astype(cdt)       # (Hs, W)
            o_ref[t] = jnp.dot(ah, plane,
                               preferred_element_type=jnp.float32,
                               precision=prec).astype(o_ref.dtype)
    return kernel


# --------------------------------------------------------------------------
# Glue
# --------------------------------------------------------------------------
def _interp_matrix(l_out, l_in):
    """Bilinear interpolation matrix, align_corners=True (PyTorch upsample_bilinear)."""
    assert l_in >= 1 and l_out >= 1
    A = np.zeros((l_out, l_in), dtype=np.float32)
    for i in range(l_out):
        src = i * (l_in - 1) / (l_out - 1) if l_out > 1 else 0.0
        i0 = int(np.floor(src))
        i1 = min(i0 + 1, l_in - 1)
        w1 = src - i0
        A[i, i0] += 1.0 - w1
        A[i, i1] += w1
    return A


def _largest_lane_tile(S, est_fn, budget):
    """Largest spatial tile (lanes) that divides S, is a multiple of 128 (or S itself),
    and whose per-step footprint fits the budget.  Prefers the whole image per step."""
    if est_fn(S) <= budget or S % 128 != 0:
        return S
    best = 128
    t = 128
    while t < S:
        if S % t == 0 and est_fn(t) <= budget:
            best = t
        t += 128
    return best


def _vmem_limit(step_bytes):
    # ~1.5x the actual per-step footprint (blocks are already double-counted for the
    # double-buffer).  No clamp to 64 MiB (v7x's whole per-core VMEM) and no artificial floor.
    return max(4 << 20, int(step_bytes * 1.5))


def op_coeffnet_forward(x, coeffs, zs, w_hyper, w_backbone, *,
                        compute_dtype=jnp.bfloat16, out_dtype=jnp.float32,
                        vmem_budget_bytes=24 << 20):
    """x: (N, Cin, H, W) NCHW.  Returns (N, D, H, W) NCHW in `out_dtype`.

    compute_dtype: dtype of the streaming MXU operands (accumulation is always f32).
    bf16 is the fast path on v5e/v6e/v7x; pass jnp.float32 for strict verification.
    out_dtype: final output dtype (f32 matches PyTorch; bf16 halves stage-2 HBM writes).
    """
    N, Cin, H, W = x.shape
    F_ = w_backbone.shape[0]                     # backbone output channels
    D = w_hyper.shape[1] // F_                   # descriptor_dimension
    cdt = jnp.dtype(compute_dtype)
    cb = cdt.itemsize
    ob = jnp.dtype(out_dtype).itemsize
    prec = HIGHEST if cdt == jnp.dtype(jnp.float32) else None

    # ---- coefficient combine + hypernet: O(base_num*z_dim + z_dim*D*F) scalars -> plain jnp.
    z = jnp.dot(coeffs.astype(jnp.float32), zs.astype(jnp.float32), precision=HIGHEST)
    w_final = jnp.dot(z, w_hyper.astype(jnp.float32), precision=HIGHEST).reshape(D, F_)

    # ---- backbone stride-2 subsample (single fused XLA prepass: slice + cast).
    x_ds = x[:, :, ::2, ::2]
    Hs, Ws = x_ds.shape[2], x_ds.shape[3]
    S = Hs * Ws
    x_flat = x_ds.reshape(N, Cin, S).astype(cdt)           # free row-major reshape

    wb = w_backbone.astype(cdt)                            # (F, Cin)
    wfd = w_final.astype(cdt)                              # (D, F)

    # ---- stage 1: backbone + hyper conv, tiled over (image, spatial tile).
    def est1(ts):
        return (2 * (Cin + D) * ts * cb                    # double-buffered in/out blocks
                + F_ * ts * (4 + cb)                       # feat f32 + compute-dtype copy
                + D * ts * 4                               # pred f32 before the output cast
                + (F_ * Cin + D * F_) * cb + (64 << 10))   # weights + slack

    TS = _largest_lane_tile(S, est1, vmem_budget_bytes)
    if N * (S // TS) < 2 and S % 128 == 0:
        # keep >= 2 grid steps so both v7x TensorCores get work
        divisors = [t for t in range(128, S, 128) if S % t == 0]
        if divisors:
            TS = max(divisors)
    n_tiles = S // TS

    pred = pl.pallas_call(
        _make_stage1_kernel(prec),
        out_shape=jax.ShapeDtypeStruct((N, D, S), cdt),
        grid=(N, n_tiles),
        in_specs=[
            pl.BlockSpec((F_, Cin), lambda n, t: (0, 0)),       # tiny constant-index weights
            pl.BlockSpec((D, F_), lambda n, t: (0, 0)),
            pl.BlockSpec((1, Cin, TS), lambda n, t: (n, 0, t)),
        ],
        out_specs=pl.BlockSpec((1, D, TS), lambda n, t: (n, 0, t)),
        compiler_params=pltpu.CompilerParams(
            dimension_semantics=("parallel", "parallel"),
            vmem_limit_bytes=_vmem_limit(est1(TS))),
    )(wb, wfd, x_flat)

    # ---- stage 2: separable bilinear upsample, TD descriptor planes per grid step.
    awT = jnp.asarray(_interp_matrix(W, Ws).T).astype(cdt)      # (Ws, W)
    ah = jnp.asarray(_interp_matrix(H, Hs)).astype(cdt)         # (H, Hs)
    pred_rows = pred.reshape(N * D * Hs, Ws)                    # free row-major reshape
    n_planes = N * D

    def est2(td):
        return (2 * (td * Hs * Ws * cb + td * H * W * ob)       # double-buffered in/out blocks
                + td * Hs * W * (4 + cb)                        # width result f32 + cast slices
                + (Ws * W + H * Hs) * cb + (64 << 10))          # interp matrices + slack

    # TD must divide N*D; TD*Hs must be a multiple of 8 (sublane tiling) unless the block
    # spans the whole row axis.  Prefer the largest TD within budget that leaves >= 2 steps.
    req = 8 // math.gcd(Hs, 8)
    candidates = [td for td in range(1, min(n_planes, 32) + 1)
                  if n_planes % td == 0 and (td % req == 0 or td == n_planes)]
    if not candidates:
        candidates = [n_planes]
    TD = candidates[0]
    for td in candidates:
        if est2(td) <= vmem_budget_bytes and n_planes // td >= 2:
            TD = td
    if n_planes // TD < 2:                                      # e.g. n_planes == 1
        for td in candidates:
            if est2(td) <= vmem_budget_bytes:
                TD = td

    out3 = pl.pallas_call(
        _make_stage2_kernel(TD, Hs, prec),
        out_shape=jax.ShapeDtypeStruct((n_planes, H, W), out_dtype),
        grid=(n_planes // TD,),
        in_specs=[
            pl.BlockSpec((Ws, W), lambda b: (0, 0)),
            pl.BlockSpec((H, Hs), lambda b: (0, 0)),
            pl.BlockSpec((TD * Hs, Ws), lambda b: (b, 0)),
        ],
        out_specs=pl.BlockSpec((TD, H, W), lambda b: (b, 0, 0)),
        compiler_params=pltpu.CompilerParams(
            dimension_semantics=("parallel",),
            vmem_limit_bytes=_vmem_limit(est2(TD))),
    )(awT, ah, pred_rows)

    return out3.reshape(N, D, H, W)              # already NCHW — no wrapper transpose needed


# --------------------------------------------------------------------------
# Pure-numpy reference (float64) of the same forward pass
# --------------------------------------------------------------------------
def reference_numpy(x, coeffs, zs, w_hyper, w_backbone):
    x = np.asarray(x, np.float64)
    coeffs = np.asarray(coeffs, np.float64)
    zs = np.asarray(zs, np.float64)
    w_hyper = np.asarray(w_hyper, np.float64)
    w_backbone = np.asarray(w_backbone, np.float64)
    z = coeffs @ zs
    F_ = w_backbone.shape[0]
    w_final = (z @ w_hyper).reshape(-1, F_)                    # (D, F)
    x_ds = x[:, :, ::2, ::2]
    feat = np.maximum(np.einsum('fc,nchw->nfhw', w_backbone, x_ds), 0.0)
    pred = np.einsum('df,nfhw->ndhw', w_final, feat)
    Ah = _interp_matrix(x.shape[2], x_ds.shape[2]).astype(np.float64)
    Aw = _interp_matrix(x.shape[3], x_ds.shape[3]).astype(np.float64)
    return np.einsum('ip,jq,ndpq->ndij', Ah, Aw, pred)


if __name__ == "__main__":
    # Small deterministic config.
    N, Cin, H, W = 2, 4, 16, 16
    z_dim, base_num = 8, 4
    feat_dim, desc_dim = 32, 8

    key = jax.random.PRNGKey(0)
    k1, k2, k3, k4 = jax.random.split(key, 4)
    x = jax.random.normal(k1, (N, Cin, H, W), jnp.float32)
    zs = jax.random.normal(k2, (base_num, z_dim), jnp.float32)
    # OPCoeffNet init: nn_init=True, index=None -> coeffs = 1/sqrt(base_num)
    coeffs = jnp.full((base_num,), 1.0 / np.sqrt(base_num), jnp.float32)
    # synthetic hypernet: Linear(z_dim -> D*F); stored as (z_dim, D*F) so z @ W_h
    w_hyper = 0.1 * jax.random.normal(k3, (z_dim, desc_dim * feat_dim), jnp.float32)
    # synthetic backbone: 1x1 conv weight (F, Cin), stride 2, ReLU
    w_backbone = 0.1 * jax.random.normal(k4, (feat_dim, Cin), jnp.float32)

    ref = reference_numpy(x, coeffs, zs, w_hyper, w_backbone)

    # strict verification path: f32 operands + HIGHEST precision on the MXU
    out_f32 = jax.block_until_ready(op_coeffnet_forward(
        x, coeffs, zs, w_hyper, w_backbone, compute_dtype=jnp.float32))
    assert out_f32.shape == (N, desc_dim, H, W)
    np.testing.assert_allclose(np.asarray(out_f32), ref, rtol=1e-3, atol=1e-3)

    # fast path (default): bf16 streaming operands, f32 accumulation, f32 output
    out_bf16 = jax.block_until_ready(op_coeffnet_forward(
        x, coeffs, zs, w_hyper, w_backbone))
    assert out_bf16.shape == (N, desc_dim, H, W)
    np.testing.assert_allclose(np.asarray(out_bf16), ref, rtol=3e-2, atol=3e-2)

    print("KERNEL_OK")
</pallas_src>

<mosaic_0001>
module attributes {stable_mosaic.version = 11 : i64} {
  func.func @kernel(%arg0: i32, %arg1: i32, %arg2: memref<32x4xf32, #tpu.memory_space<vmem>>, %arg3: memref<8x32xf32, #tpu.memory_space<vmem>>, %arg4: memref<1x4x64xf32, #tpu.memory_space<vmem>>, %arg5: memref<1x8x64xf32, #tpu.memory_space<vmem>>) attributes {dimension_semantics = [#tpu.dimension_semantics<parallel>, #tpu.dimension_semantics<parallel>], iteration_bounds = array<i64: 2, 1>, scalar_prefetch = 0 : i64, scratch_operands = 0 : i64, tpu.core_type = #tpu.core_type<tc>, window_params = [{pipeline_mode = #tpu.pipeline_mode<synchronous>, transform_indices = @transform_0, window_bounds = array<i64: 32, 4>}, {pipeline_mode = #tpu.pipeline_mode<synchronous>, transform_indices = @transform_1, window_bounds = array<i64: 8, 32>}, {transform_indices = @transform_2, window_bounds = array<i64: 1, 4, 64>}, {transform_indices = @transform_3, window_bounds = array<i64: 1, 8, 64>}]} {
    %c0 = arith.constant 0 : index
    %c0_0 = arith.constant 0 : index
    %c0_1 = arith.constant 0 : index
    %0 = vector.load %arg4[%c0, %c0_0, %c0_1] : memref<1x4x64xf32, #tpu.memory_space<vmem>>, vector<1x4x64xf32>
    %1 = vector.shape_cast %0 : vector<1x4x64xf32> to vector<4x64xf32>
    %c0_2 = arith.constant 0 : index
    %c0_3 = arith.constant 0 : index
    %2 = vector.load %arg2[%c0_2, %c0_3] : memref<32x4xf32, #tpu.memory_space<vmem>>, vector<32x4xf32>
    %cst = arith.constant dense<0.000000e+00> : vector<32x64xf32>
    %3 = tpu.matmul %2, %1, %cst {dimension_numbers = #tpu.dot_dimension_numbers<[1], [0], [0], [1], [0, 0, 1, 1], [], []>, precision = #tpu.contract_precision<fp32>} : vector<32x4xf32>, vector<4x64xf32>, vector<32x64xf32> -> vector<32x64xf32>
    %cst_4 = arith.constant 0.000000e+00 : f32
    %4 = vector.broadcast %cst_4 : f32 to vector<32x64xf32>
    %5 = arith.maximumf %3, %4 : vector<32x64xf32>
    %c0_5 = arith.constant 0 : index
    %c0_6 = arith.constant 0 : index
    %6 = vector.load %arg3[%c0_5, %c0_6] : memref<8x32xf32, #tpu.memory_space<vmem>>, vector<8x32xf32>
    %cst_7 = arith.constant dense<0.000000e+00> : vector<8x64xf32>
    %7 = tpu.matmul %6, %5, %cst_7 {dimension_numbers = #tpu.dot_dimension_numbers<[1], [0], [0], [1], [0, 0, 1, 1], [], []>, precision = #tpu.contract_precision<fp32>} : vector<8x32xf32>, vector<32x64xf32>, vector<8x64xf32> -> vector<8x64xf32>
    %c0_8 = arith.constant 0 : index
    %c0_9 = arith.constant 0 : index
    %c0_10 = arith.constant 0 : index
    %8 = vector.load %arg5[%c0_8, %c0_9, %c0_10] : memref<1x8x64xf32, #tpu.memory_space<vmem>>, vector<1x8x64xf32>
    %9 = vector.shape_cast %8 : vector<1x8x64xf32> to vector<8x64xf32>
    %10 = vector.shape_cast %7 : vector<8x64xf32> to vector<1x8x64xf32>
    tpu.vector_store %arg5[%c0_8, %c0_9, %c0_10], %10 {strides = array<i32>} : memref<1x8x64xf32, #tpu.memory_space<vmem>>, vector<1x8x64xf32>,
    return
  }
  func.func @transform_0(%arg0: i32, %arg1: i32) -> (i32, i32) {
    %c0_i32 = arith.constant 0 : i32
    %c0_i32_0 = arith.constant 0 : i32
    %c0_i32_1 = arith.constant 0 : i32
    return %c0_i32, %c0_i32_0 : i32, i32
  }
  func.func @transform_1(%arg0: i32, %arg1: i32) -> (i32, i32) {
    %c0_i32 = arith.constant 0 : i32
    %c0_i32_0 = arith.constant 0 : i32
    %c0_i32_1 = arith.constant 0 : i32
    return %c0_i32, %c0_i32_0 : i32, i32
  }
  func.func @transform_2(%arg0: i32, %arg1: i32) -> (i32, i32, i32) {
    %c0_i32 = arith.constant 0 : i32
    %c0_i32_0 = arith.constant 0 : i32
    return %arg0, %c0_i32, %arg1 : i32, i32, i32
  }
  func.func @transform_3(%arg0: i32, %arg1: i32) -> (i32, i32, i32) {
    %c0_i32 = arith.constant 0 : i32
    %c0_i32_0 = arith.constant 0 : i32
    return %arg0, %c0_i32, %arg1 : i32, i32, i32
  }
}

</mosaic_0001>

<llo_original>
// kernel: tpu_custom_call.1
$region0: #{tpu_custom_call.1}
  #allocation0 [shape = 'u32[]', space=smem, size = 0x4, offset = 0x4, fixed_abs, tag = 'smem constant byte address 0x4 - core index']
  #allocation1 [shape = 'u32[144,128]{1,0:T(1,128)}', space=vmem, size = 0x12000, scoped, tag = 'internal scratch']
  %s0 = inlined_call_operand.vmem [shape: f32[32,4], index: 0, kind: input, shape index: {}]
  %s1 = inlined_call_operand.vmem [shape: f32[8,32], index: 1, kind: input, shape index: {}]
  %s2 = inlined_call_operand.vmem [shape: f32[2,4,64], index: 2, kind: input, shape index: {}]
  %s3 = inlined_call_operand.hbm [shape: f32[2,8,64], index: 3, kind: output, shape index: {}]
  %s4 = sld [smem:[#allocation0]]
  $region45: #{tpu_custom_call.1} parent=0
    _
  %s6 = ssub.s32 1, %s4
  %s7 = scalar_select 0, %s6, %s4
  $region1: #{tpu_custom_call.1} parent=0
    #allocation2 [shape = 'u8[8192]{0}', space=vmem, size = 0x2000, scoped, tag = 'output window, operand 0']
    #allocation3 [shape = 's32[2]{0}', space=sflag, size = 0x8, scoped, tag = 'scoped memory for tpu_custom_call.1']
    %8 = vsyncpa [#allocation3], 0
    %s9 = scalar_lea.sflag [#allocation3], 1
    %10 = vsyncpa %s9, 0
    loop: start=0, step=1, limit=4
    $region2: #{tpu_custom_call.1} parent=1 // loop_pre_header
      _
    $region3: #{tpu_custom_call.1} parent=1 // loop_header
      %s12 = sphi 0, %s16
      %p13 = scmp.ge.s32.totalorder %s12, 4
      %s19 = sphi 0, %s31
      %s20 = sphi 0, %s27
      %s21 = sphi 0, %s19
      %s22 = sphi 0, %s20
      %s23 = sphi 0, %s21
      %s24 = sphi 0, %s22
      %s32 = sphi 0, %s32
      %s34 = sphi 0, %s32
      %s35 = sphi 0, %s34
      %s49 = sphi 0, %s35
      %s53 = sphi 0, %s53
      %s55 = sphi 0, %s53
      %s56 = sphi 0, %s55
      %s70 = sphi 0, %s56
      %s78 = sphi 0, %s80
      %s81 = sphi 0, %s78
      %s82 = sphi 0, %s81
      %s98 = sphi 0, %s82
      %s106 = sphi 0, %s108
      %s109 = sphi 0, %s106
      %s110 = sphi 0, %s109
      %s126 = sphi 0, %s110
    $region4: #{tpu_custom_call.1} parent=1 // loop_header_branch
      %15 = sbr.rel (%p13) target = $region8
    $region5: #{tpu_custom_call.1} parent=1 // loop_body
      %s17 = ssub.s32 %s12, 1
      %s18 = ssub.s32 %s12, 2
      %s25 = sadd.s32 1, %s20
      %p26 = scmp.ge.s32.totalorder %s25, 1
      %s27 = scalar_select %p26, 0, %s25
      %s28 = sadd.s32 1, %s19
      %s29 = scalar_select %p26, %s28, %s19
      %p30 = scmp.ge.s32.totalorder %s29, 2
      %s31 = scalar_select %p30, 0, %s29
      %s33 = sadd.s32 %s32, 1
      %p36 = scmp.eq.s32.totalorder %s12, 1
      %p37 = scmp.ne.s32.totalorder %s32, %s34
      %p38 = scmp.eq.s32.totalorder %s12, 0
      %p39 = por %p37, %p38
      %p40 = scmp.ne.s32.totalorder %s32, %s34
      %p41 = scmp.eq.s32.totalorder %s17, 1
      %p42 = por %p40, %p41
      %p43 = scmp.ne.s32.totalorder %s34, %s35
      %p44 = scmp.eq.s32.totalorder %s17, 0
      %p45 = por %p43, %p44
      %p46 = scmp.ne.s32.totalorder %s34, %s35
      %p47 = scmp.eq.s32.totalorder %s18, 1
      %p48 = por %p46, %p47
      %p50 = scmp.ne.s32.totalorder %s35, %s49
      %p51 = scmp.eq.s32.totalorder %s18, 0
      %p52 = por %p50, %p51
      %s54 = sadd.s32 %s53, 1
      %p57 = scmp.eq.s32.totalorder %s12, 1
      %p58 = scmp.ne.s32.totalorder %s53, %s55
      %p59 = scmp.eq.s32.totalorder %s12, 0
      %p60 = por %p58, %p59
      %p61 = scmp.ne.s32.totalorder %s53, %s55
      %p62 = scmp.eq.s32.totalorder %s17, 1
      %p63 = por %p61, %p62
      %p64 = scmp.ne.s32.totalorder %s55, %s56
      %p65 = scmp.eq.s32.totalorder %s17, 0
      %p66 = por %p64, %p65
      %p67 = scmp.ne.s32.totalorder %s55, %s56
      %p68 = scmp.eq.s32.totalorder %s18, 1
      %p69 = por %p67, %p68
      %p71 = scmp.ne.s32.totalorder %s56, %s70
      %p72 = scmp.eq.s32.totalorder %s18, 0
      %p73 = por %p71, %p72
      %s74 = ssub.s32 %s19, %s31
      %s75 = ssub.s32 %s20, %s27
      %s76 = sor.u32 %s74, %s75
      %p77 = scmp.eq.s32.totalorder %s76, 0
      %s79 = sadd.s32 %s78, 1
      %s80 = scalar_select %p77, %s78, %s79
      %p83 = pneg %p77
      %p84 = scmp.eq.s32.totalorder %s12, 1
      %p85 = por %p83, %p84
      %p86 = scmp.ne.s32.totalorder %s78, %s81
      %p87 = scmp.eq.s32.totalorder %s12, 0
      %p88 = por %p86, %p87
      %p89 = scmp.ne.s32.totalorder %s78, %s81
      %p90 = scmp.eq.s32.totalorder %s17, 1
      %p91 = por %p89, %p90
      %p92 = scmp.ne.s32.totalorder %s81, %s82
      %p93 = scmp.eq.s32.totalorder %s17, 0
      %p94 = por %p92, %p93
      %p95 = scmp.ne.s32.totalorder %s81, %s82
      %p96 = scmp.eq.s32.totalorder %s18, 1
      %p97 = por %p95, %p96
      %p99 = scmp.ne.s32.totalorder %s82, %s98
      %p100 = scmp.eq.s32.totalorder %s18, 0
      %p101 = por %p99, %p100
      %s102 = ssub.s32 %s19, %s31
      %s103 = ssub.s32 %s20, %s27
      %s104 = sor.u32 %s102, %s103
      %p105 = scmp.eq.s32.totalorder %s104, 0
      %s107 = sadd.s32 %s106, 1
      %s108 = scalar_select %p105, %s106, %s107
      %p111 = pneg %p105
      %p112 = scmp.eq.s32.totalorder %s12, 1
      %p113 = por %p111, %p112
      %p114 = scmp.ne.s32.totalorder %s106, %s109
      %p115 = scmp.eq.s32.totalorder %s12, 0
      %p116 = por %p114, %p115
      %p117 = scmp.ne.s32.totalorder %s106, %s109
      %p118 = scmp.eq.s32.totalorder %s17, 1
      %p119 = por %p117, %p118
      %p120 = scmp.ne.s32.totalorder %s109, %s110
      %p121 = scmp.eq.s32.totalorder %s17, 0
      %p122 = por %p120, %p121
      %p123 = scmp.ne.s32.totalorder %s109, %s110
      %p124 = scmp.eq.s32.totalorder %s18, 1
      %p125 = por %p123, %p124
      %p127 = scmp.ne.s32.totalorder %s110, %s126
      %p128 = scmp.eq.s32.totalorder %s18, 0
      %p129 = por %p127, %p128
      %p130 = scmp.le.s32.totalorder 1, %s12
      %p131 = scmp.lt.s32.totalorder %s12, 3
      %p132 = pnand %p130, %p131
      %p133 = pneg %p132
      // Predicated region
      $region9: #{tpu_custom_call.1} parent=5 // pred_check
        _
      $region10: #{tpu_custom_call.1} parent=5 // pred_check_branch
        %135 = sbr.rel (%p132) target = $region12
      $region11: #{tpu_custom_call.1} parent=5 // pred_region
        %s136 = ssub.s32 %s12, 1
        // Predicated region
        $region13: #{tpu_custom_call.1} parent=11 // pred_check
          %p137 = pneg %p45
        $region14: #{tpu_custom_call.1} parent=11 // pred_check_branch
          %139 = sbr.rel (%p137) target = $region16
        $region15: #{tpu_custom_call.1} parent=11 // pred_region
          _
        $region16: #{tpu_custom_call.1} parent=11 // pred_fallthru
          _
        // Predicated region
        $region17: #{tpu_custom_call.1} parent=11 // pred_check
          %p140 = pneg %p66
        $region18: #{tpu_custom_call.1} parent=11 // pred_check_branch
          %142 = sbr.rel (%p140) target = $region20
        $region19: #{tpu_custom_call.1} parent=11 // pred_region
          _
        $region20: #{tpu_custom_call.1} parent=11 // pred_fallthru
          _
      $region12: #{tpu_custom_call.1} parent=5 // pred_fallthru
        _
      %p143 = scmp.lt.s32.totalorder %s12, 2
      // Predicated region
      $region21: #{tpu_custom_call.1} parent=5 // pred_check
        %p144 = pneg %p143
      $region22: #{tpu_custom_call.1} parent=5 // pred_check_branch
        %146 = sbr.rel (%p144) target = $region24
      $region23: #{tpu_custom_call.1} parent=5 // pred_region
        // Predicated region
        $region25: #{tpu_custom_call.1} parent=23 // pred_check
          %p147 = pneg %p88
        $region26: #{tpu_custom_call.1} parent=23 // pred_check_branch
          %149 = sbr.rel (%p147) target = $region28
        $region27: #{tpu_custom_call.1} parent=23 // pred_region
          %p150 = scmp.lt.s32.totalorder %s19, 1
          %s151 = scalar_select %p150, %s19, 1
          %p152 = scmp.lt.s32.totalorder %s20, 0
          %s153 = scalar_select %p152, %s20, 0
          %s154 = sadd.s32 %s153, %s151
          %s155 = smul.addr %s154, 4
          %s156 = scalar_lea.vmem %s2, %s155
        $region28: #{tpu_custom_call.1} parent=23 // pred_fallthru
          _
      $region24: #{tpu_custom_call.1} parent=5 // pred_fallthru
        _
      %p157 = scmp.le.s32.totalorder 1, %s12
      %p158 = scmp.lt.s32.totalorder %s12, 3
      %p159 = pnand %p157, %p158
      %p160 = pneg %p159
      // Predicated region
      $region29: #{tpu_custom_call.1} parent=5 // pred_check
        _
      $region30: #{tpu_custom_call.1} parent=5 // pred_check_branch
        %162 = sbr.rel (%p159) target = $region32
      $region31: #{tpu_custom_call.1} parent=5 // pred_region
        %s163 = ssub.s32 %s12, 1
        %p164 = pneg %p45
        %p165 = pneg %p42
        %p166 = pneg %p66
        %p167 = pneg %p63
        %p168 = scmp.lt.s32.totalorder %s21, 1
        %s169 = scalar_select %p168, %s21, 1
        %p170 = scmp.lt.s32.totalorder %s22, 0
        %s171 = scalar_select %p170, %s22, 0
        %s172 = sadd.s32 %s171, %s169
        %s173 = smul.addr %s172, 4
        %s174 = scalar_lea.vmem %s2, %s173
        %p175 = pneg %p94
        %p176 = pneg %p91
        %p177 = pneg %p122
        %p178 = pneg %p119
        %s179 = sand.u32 %s109, 1
        %s180 = scalar_lea.sflag [#allocation3], %s179
        %s181 = sand.u32 %s109, 1
        %s182 = smul.addr %s181, 8
        %s183 = scalar_lea.vmem [#allocation2], %s182
        %p184 = scmp.lt.s32.totalorder %s21, 1
        %s185 = scalar_select %p184, %s21, 1
        %p186 = scmp.lt.s32.totalorder %s22, 0
        %s187 = scalar_select %p186, %s22, 0
        %s188 = sadd.s32 %s187, %s185
        %s189 = smul.addr %s188, 4
        %s190 = scalar_lea.vmem %s2, %s189
        %v191 = vld [vmem:[%s190] sm:$0xf]
        %v192 = vld [vmem:[%s0] sm:$0xff]
        %v193 = vld [vmem:[%s0 + $0x8] sm:$0xff]
        %v194 = vld [vmem:[%s0 + $0x10] sm:$0xff]
        %v195 = vld [vmem:[%s0 + $0x18] sm:$0xff]
        %vm196 = vcmask 31744
        %v198 = vsel %vm196, %v192, 0
        %v201 = vsel %vm196, %v193, 0
        %v204 = vsel %vm196, %v194, 0
        %v207 = vsel %vm196, %v195, 0
        %vm209 = vcmask 1043456
        %v211 = vsel %vm209, %v191, 0
        %213 = vmatprep.subr.mxu0 0.0
        %v214 = vand.u32 %v211, 4294901760
        %215 = vmatpush1.msra.mxu0 %v214
        %216 = vmatprep.subr.mxu0 0.0
        %217 = vmatpush1.msra.mxu0 0.0
        %218 = vmatprep.subr.mxu0 0.0
        %219 = vmatpush1.msra.mxu0 0.0
        %220 = vmatprep.subr.mxu0 0.0
        %221 = vmatpush1.msra.mxu0 0.0
        %222 = vmatprep.subr.mxu0 0.0
        %223 = vmatpush1.msra.mxu0 0.0
        %224 = vmatprep.subr.mxu0 0.0
        %225 = vmatpush1.msra.mxu0 0.0
        %226 = vmatprep.subr.mxu0 0.0
        %227 = vmatpush1.msra.mxu0 0.0
        %228 = vmatprep.subr.mxu0 0.0
        %229 = vmatpush1.msra.mxu0 0.0
        %230 = vmatprep.subr.mxu0 0.0
        %231 = vmatpush1.msra.mxu0 0.0
        %232 = vmatprep.subr.mxu0 0.0
        %233 = vmatpush1.msra.mxu0 0.0
        %234 = vmatprep.subr.mxu0 0.0
        %235 = vmatpush1.msra.mxu0 0.0
        %236 = vmatprep.subr.mxu0 0.0
        %237 = vmatpush1.msra.mxu0 0.0
        %238 = vmatprep.subr.mxu0 0.0
        %239 = vmatpush1.msra.mxu0 0.0
        %240 = vmatprep.subr.mxu0 0.0
        %241 = vmatpush1.msra.mxu0 0.0
        %242 = vmatprep.subr.mxu0 0.0
        %243 = vmatpush1.msra.mxu0 0.0
        %244 = vmatprep.subr.mxu0 0.0
        %245 = vmatpush1.msra.mxu0 0.0
        %246 = vmatprep.subr.mxu0 0.0
        %247 = vmatpush1.msra.mxu0 0.0
        %248 = vmatprep.subr.mxu0 0.0
        %249 = vmatpush1.msra.mxu0 0.0
        %250 = vmatprep.subr.mxu0 0.0
        %251 = vmatpush1.msra.mxu0 0.0
        %252 = vmatprep.subr.mxu0 0.0
        %253 = vmatpush1.msra.mxu0 0.0
        %254 = vmatprep.subr.mxu0 0.0
        %255 = vmatpush1.msra.mxu0 0.0
        %256 = vmatprep.subr.mxu0 0.0
        %257 = vmatpush1.msra.mxu0 0.0
        %258 = vmatprep.subr.mxu0 0.0
        %259 = vmatpush1.msra.mxu0 0.0
        %260 = vmatprep.subr.mxu0 0.0
        %261 = vmatpush1.msra.mxu0 0.0
        %262 = vmatprep.subr.mxu0 0.0
        %263 = vmatpush1.msra.mxu0 0.0
        %264 = vmatprep.subr.mxu0 0.0
        %265 = vmatpush1.msra.mxu0 0.0
        %266 = vmatprep.subr.mxu0 0.0
        %267 = vmatpush1.msra.mxu0 0.0
        %268 = vmatprep.subr.mxu0 0.0
        %269 = vmatpush1.msra.mxu0 0.0
        %270 = vmatprep.subr.mxu0 0.0
        %271 = vmatpush1.msra.mxu0 0.0
        %272 = vmatprep.subr.mxu0 0.0
        %273 = vmatpush1.msra.mxu0 0.0
        %274 = vmatprep.subr.mxu0 0.0
        %275 = vmatpush1.msra.mxu0 0.0
        %276 = vmatprep.subr.mxu0 0.0
        %277 = vmatpush1.msra.mxu0 0.0
        %278 = vmatprep.mubr.f32.mxu0 0.0
        %v279 = vand.u32 %v198, 4294901760
        %v280 = vsub.f32 %v198, %v279
        %v281 = vand.u32 %v280, 4294901760
        %v282 = vsub.f32 %v280, %v281
        %v283 = vand.u32 %v282, 4294901760
        %284 = vmatmul.mubr.f32.gmra.mrb[0].mxu0 %v283
        %v285 = vpop.f32.mrb[0].mxu0
        %v286 = vadd.f32 0.0, %v285
        %v287 = vpop.f32.mrb[0].mxu0
        %288 = vmatprep.mubr.f32.mxu0 0.0
        %v289 = vand.u32 %v201, 4294901760
        %v290 = vsub.f32 %v201, %v289
        %v291 = vand.u32 %v290, 4294901760
        %v292 = vsub.f32 %v290, %v291
        %v293 = vand.u32 %v292, 4294901760
        %294 = vmatmul.mubr.f32.gmra.mrb[0].mxu0 %v293
        %v295 = vpop.f32.mrb[0].mxu0
        %v296 = vadd.f32 0.0, %v295
        %v297 = vpop.f32.mrb[0].mxu0
        %298 = vmatprep.mubr.f32.mxu0 0.0
        %v299 = vand.u32 %v204, 4294901760
        %v300 = vsub.f32 %v204, %v299
        %v301 = vand.u32 %v300, 4294901760
        %v302 = vsub.f32 %v300, %v301
        %v303 = vand.u32 %v302, 4294901760
        %304 = vmatmul.mubr.f32.gmra.mrb[0].mxu0 %v303
        %v305 = vpop.f32.mrb[0].mxu0
        %v306 = vadd.f32 0.0, %v305
        %v307 = vpop.f32.mrb[0].mxu0
        %308 = vmatprep.mubr.f32.mxu0 0.0
        %v309 = vand.u32 %v207, 4294901760
        %v310 = vsub.f32 %v207, %v309
        %v311 = vand.u32 %v310, 4294901760
        %v312 = vsub.f32 %v310, %v311
        %v313 = vand.u32 %v312, 4294901760
        %314 = vmatmul.mubr.f32.gmra.mrb[0].mxu0 %v313
        %v315 = vpop.f32.mrb[0].mxu0
        %v316 = vadd.f32 0.0, %v315
        %v317 = vpop.f32.mrb[0].mxu0
        %318 = vdwg.mxu0
        %319 = vmatprep.subr.mxu0 0.0
        %v320 = vand.u32 %v211, 4294901760
        %v321 = vsub.f32 %v211, %v320
        %v322 = vand.u32 %v321, 4294901760
        %v323 = vsub.f32 %v321, %v322
        %v324 = vand.u32 %v323, 4294901760
        %325 = vmatpush1.msra.mxu0 %v324
        %326 = vmatprep.subr.mxu0 0.0
        %327 = vmatpush1.msra.mxu0 0.0
        %328 = vmatprep.subr.mxu0 0.0
        %329 = vmatpush1.msra.mxu0 0.0
        %330 = vmatprep.subr.mxu0 0.0
        %331 = vmatpush1.msra.mxu0 0.0
        %332 = vmatprep.subr.mxu0 0.0
        %333 = vmatpush1.msra.mxu0 0.0
        %334 = vmatprep.subr.mxu0 0.0
        %335 = vmatpush1.msra.mxu0 0.0
        %336 = vmatprep.subr.mxu0 0.0
        %337 = vmatpush1.msra.mxu0 0.0
        %338 = vmatprep.subr.mxu0 0.0
        %339 = vmatpush1.msra.mxu0 0.0
        %340 = vmatprep.subr.mxu0 0.0
        %341 = vmatpush1.msra.mxu0 0.0
        %342 = vmatprep.subr.mxu0 0.0
        %343 = vmatpush1.msra.mxu0 0.0
        %344 = vmatprep.subr.mxu0 0.0
        %345 = vmatpush1.msra.mxu0 0.0
        %346 = vmatprep.subr.mxu0 0.0
        %347 = vmatpush1.msra.mxu0 0.0
        %348 = vmatprep.subr.mxu0 0.0
        %349 = vmatpush1.msra.mxu0 0.0
        %350 = vmatprep.subr.mxu0 0.0
        %351 = vmatpush1.msra.mxu0 0.0
        %352 = vmatprep.subr.mxu0 0.0
        %353 = vmatpush1.msra.mxu0 0.0
        %354 = vmatprep.subr.mxu0 0.0
        %355 = vmatpush1.msra.mxu0 0.0
        %356 = vmatprep.subr.mxu0 0.0
        %357 = vmatpush1.msra.mxu0 0.0
        %358 = vmatprep.subr.mxu0 0.0
        %359 = vmatpush1.msra.mxu0 0.0
        %360 = vmatprep.subr.mxu0 0.0
        %361 = vmatpush1.msra.mxu0 0.0
        %362 = vmatprep.subr.mxu0 0.0
        %363 = vmatpush1.msra.mxu0 0.0
        %364 = vmatprep.subr.mxu0 0.0
        %365 = vmatpush1.msra.mxu0 0.0
        %366 = vmatprep.subr.mxu0 0.0
        %367 = vmatpush1.msra.mxu0 0.0
        %368 = vmatprep.subr.mxu0 0.0
        %369 = vmatpush1.msra.mxu0 0.0
        %370 = vmatprep.subr.mxu0 0.0
        %371 = vmatpush1.msra.mxu0 0.0
        %372 = vmatprep.subr.mxu0 0.0
        %373 = vmatpush1.msra.mxu0 0.0
        %374 = vmatprep.subr.mxu0 0.0
        %375 = vmatpush1.msra.mxu0 0.0
        %376 = vmatprep.subr.mxu0 0.0
        %377 = vmatpush1.msra.mxu0 0.0
        %378 = vmatprep.subr.mxu0 0.0
        %379 = vmatpush1.msra.mxu0 0.0
        %380 = vmatprep.subr.mxu0 0.0
        %381 = vmatpush1.msra.mxu0 0.0
        %382 = vmatprep.subr.mxu0 0.0
        %383 = vmatpush1.msra.mxu0 0.0
        %384 = vmatprep.subr.mxu0 0.0
        %385 = vmatpush1.msra.mxu0 0.0
        %386 = vmatprep.subr.mxu0 0.0
        %387 = vmatpush1.msra.mxu0 0.0
        %388 = vmatprep.mubr.f32.mxu0 0.0
        %v389 = vand.u32 %v198, 4294901760
        %390 = vmatmul.mubr.f32.gmra.mrb[0].mxu0 %v389
        %v391 = vpop.f32.mrb[0].mxu0
        %v392 = vadd.f32 %v286, %v391
        %v393 = vpop.f32.mrb[0].mxu0
        %394 = vmatprep.mubr.f32.mxu0 0.0
        %v395 = vand.u32 %v201, 4294901760
        %396 = vmatmul.mubr.f32.gmra.mrb[0].mxu0 %v395
        %v397 = vpop.f32.mrb[0].mxu0
        %v398 = vadd.f32 %v296, %v397
        %v399 = vpop.f32.mrb[0].mxu0
        %400 = vmatprep.mubr.f32.mxu0 0.0
        %v401 = vand.u32 %v204, 4294901760
        %402 = vmatmul.mubr.f32.gmra.mrb[0].mxu0 %v401
        %v403 = vpop.f32.mrb[0].mxu0
        %v404 = vadd.f32 %v306, %v403
        %v405 = vpop.f32.mrb[0].mxu0
        %406 = vmatprep.mubr.f32.mxu0 0.0
        %v407 = vand.u32 %v207, 4294901760
        %408 = vmatmul.mubr.f32.gmra.mrb[0].mxu0 %v407
        %v409 = vpop.f32.mrb[0].mxu0
        %v410 = vadd.f32 %v316, %v409
        %v411 = vpop.f32.mrb[0].mxu0
        %412 = vdwg.mxu0
        %413 = vmatprep.subr.mxu0 0.0
        %v414 = vand.u32 %v211, 4294901760
        %v415 = vsub.f32 %v211, %v414
        %416 = vmatpush1.msra.mxu0 %v415
        %417 = vmatprep.subr.mxu0 0.0
        %418 = vmatpush1.msra.mxu0 0.0
        %419 = vmatprep.subr.mxu0 0.0
        %420 = vmatpush1.msra.mxu0 0.0
        %421 = vmatprep.subr.mxu0 0.0
        %422 = vmatpush1.msra.mxu0 0.0
        %423 = vmatprep.subr.mxu0 0.0
        %424 = vmatpush1.msra.mxu0 0.0
        %425 = vmatprep.subr.mxu0 0.0
        %426 = vmatpush1.msra.mxu0 0.0
        %427 = vmatprep.subr.mxu0 0.0
        %428 = vmatpush1.msra.mxu0 0.0
        %429 = vmatprep.subr.mxu0 0.0
        %430 = vmatpush1.msra.mxu0 0.0
        %431 = vmatprep.subr.mxu0 0.0
        %432 = vmatpush1.msra.mxu0 0.0
        %433 = vmatprep.subr.mxu0 0.0
        %434 = vmatpush1.msra.mxu0 0.0
        %435 = vmatprep.subr.mxu0 0.0
        %436 = vmatpush1.msra.mxu0 0.0
        %437 = vmatprep.subr.mxu0 0.0
        %438 = vmatpush1.msra.mxu0 0.0
        %439 = vmatprep.subr.mxu0 0.0
        %440 = vmatpush1.msra.mxu0 0.0
        %441 = vmatprep.subr.mxu0 0.0
        %442 = vmatpush1.msra.mxu0 0.0
        %443 = vmatprep.subr.mxu0 0.0
        %444 = vmatpush1.msra.mxu0 0.0
        %445 = vmatprep.subr.mxu0 0.0
        %446 = vmatpush1.msra.mxu0 0.0
        %447 = vmatprep.subr.mxu0 0.0
        %448 = vmatpush1.msra.mxu0 0.0
        %449 = vmatprep.subr.mxu0 0.0
        %450 = vmatpush1.msra.mxu0 0.0
        %451 = vmatprep.subr.mxu0 0.0
        %452 = vmatpush1.msra.mxu0 0.0
        %453 = vmatprep.subr.mxu0 0.0
        %454 = vmatpush1.msra.mxu0 0.0
        %455 = vmatprep.subr.mxu0 0.0
        %456 = vmatpush1.msra.mxu0 0.0
        %457 = vmatprep.subr.mxu0 0.0
        %458 = vmatpush1.msra.mxu0 0.0
        %459 = vmatprep.subr.mxu0 0.0
        %460 = vmatpush1.msra.mxu0 0.0
        %461 = vmatprep.subr.mxu0 0.0
        %462 = vmatpush1.msra.mxu0 0.0
        %463 = vmatprep.subr.mxu0 0.0
        %464 = vmatpush1.msra.mxu0 0.0
        %465 = vmatprep.subr.mxu0 0.0
        %466 = vmatpush1.msra.mxu0 0.0
        %467 = vmatprep.subr.mxu0 0.0
        %468 = vmatpush1.msra.mxu0 0.0
        %469 = vmatprep.subr.mxu0 0.0
        %470 = vmatpush1.msra.mxu0 0.0
        %471 = vmatprep.subr.mxu0 0.0
        %472 = vmatpush1.msra.mxu0 0.0
        %473 = vmatprep.subr.mxu0 0.0
        %474 = vmatpush1.msra.mxu0 0.0
        %475 = vmatprep.subr.mxu0 0.0
        %476 = vmatpush1.msra.mxu0 0.0
        %477 = vmatprep.subr.mxu0 0.0
        %478 = vmatpush1.msra.mxu0 0.0
        %479 = vmatprep.mubr.f32.mxu0 0.0
        %v480 = vand.u32 %v198, 4294901760
        %v481 = vsub.f32 %v198, %v480
        %482 = vmatmul.mubr.f32.gmra.mrb[0].mxu0 %v481
        %v483 = vpop.f32.mrb[0].mxu0
        %v484 = vadd.f32 %v392, %v483
        %v485 = vpop.f32.mrb[0].mxu0
        %486 = vmatprep.mubr.f32.mxu0 0.0
        %v487 = vand.u32 %v201, 4294901760
        %v488 = vsub.f32 %v201, %v487
        %489 = vmatmul.mubr.f32.gmra.mrb[0].mxu0 %v488
        %v490 = vpop.f32.mrb[0].mxu0
        %v491 = vadd.f32 %v398, %v490
        %v492 = vpop.f32.mrb[0].mxu0
        %493 = vmatprep.mubr.f32.mxu0 0.0
        %v494 = vand.u32 %v204, 4294901760
        %v495 = vsub.f32 %v204, %v494
        %496 = vmatmul.mubr.f32.gmra.mrb[0].mxu0 %v495
        %v497 = vpop.f32.mrb[0].mxu0
        %v498 = vadd.f32 %v404, %v497
        %v499 = vpop.f32.mrb[0].mxu0
        %500 = vmatprep.mubr.f32.mxu0 0.0
        %v501 = vand.u32 %v207, 4294901760
        %v502 = vsub.f32 %v207, %v501
        %503 = vmatmul.mubr.f32.gmra.mrb[0].mxu0 %v502
        %v504 = vpop.f32.mrb[0].mxu0
        %v505 = vadd.f32 %v410, %v504
        %v506 = vpop.f32.mrb[0].mxu0
        %507 = vdwg.mxu0
        %508 = vmatprep.subr.mxu0 0.0
        %v509 = vand.u32 %v211, 4294901760
        %510 = vmatpush1.msra.mxu0 %v509
        %511 = vmatprep.subr.mxu0 0.0
        %512 = vmatpush1.msra.mxu0 0.0
        %513 = vmatprep.subr.mxu0 0.0
        %514 = vmatpush1.msra.mxu0 0.0
        %515 = vmatprep.subr.mxu0 0.0
        %516 = vmatpush1.msra.mxu0 0.0
        %517 = vmatprep.subr.mxu0 0.0
        %518 = vmatpush1.msra.mxu0 0.0
        %519 = vmatprep.subr.mxu0 0.0
        %520 = vmatpush1.msra.mxu0 0.0
        %521 = vmatprep.subr.mxu0 0.0
        %522 = vmatpush1.msra.mxu0 0.0
        %523 = vmatprep.subr.mxu0 0.0
        %524 = vmatpush1.msra.mxu0 0.0
        %525 = vmatprep.subr.mxu0 0.0
        %526 = vmatpush1.msra.mxu0 0.0
        %527 = vmatprep.subr.mxu0 0.0
        %528 = vmatpush1.msra.mxu0 0.0
        %529 = vmatprep.subr.mxu0 0.0
        %530 = vmatpush1.msra.mxu0 0.0
        %531 = vmatprep.subr.mxu0 0.0
        %532 = vmatpush1.msra.mxu0 0.0
        %533 = vmatprep.subr.mxu0 0.0
        %534 = vmatpush1.msra.mxu0 0.0
        %535 = vmatprep.subr.mxu0 0.0
        %536 = vmatpush1.msra.mxu0 0.0
        %537 = vmatprep.subr.mxu0 0.0
        %538 = vmatpush1.msra.mxu0 0.0
        %539 = vmatprep.subr.mxu0 0.0
        %540 = vmatpush1.msra.mxu0 0.0
        %541 = vmatprep.subr.mxu0 0.0
        %542 = vmatpush1.msra.mxu0 0.0
        %543 = vmatprep.subr.mxu0 0.0
        %544 = vmatpush1.msra.mxu0 0.0
        %545 = vmatprep.subr.mxu0 0.0
        %546 = vmatpush1.msra.mxu0 0.0
        %547 = vmatprep.subr.mxu0 0.0
        %548 = vmatpush1.msra.mxu0 0.0
        %549 = vmatprep.subr.mxu0 0.0
        %550 = vmatpush1.msra.mxu0 0.0
        %551 = vmatprep.subr.mxu0 0.0
        %552 = vmatpush1.msra.mxu0 0.0
        %553 = vmatprep.subr.mxu0 0.0
        %554 = vmatpush1.msra.mxu0 0.0
        %555 = vmatprep.subr.mxu0 0.0
        %556 = vmatpush1.msra.mxu0 0.0
        %557 = vmatprep.subr.mxu0 0.0
        %558 = vmatpush1.msra.mxu0 0.0
        %559 = vmatprep.subr.mxu0 0.0
        %560 = vmatpush1.msra.mxu0 0.0
        %561 = vmatprep.subr.mxu0 0.0
        %562 = vmatpush1.msra.mxu0 0.0
        %563 = vmatprep.subr.mxu0 0.0
        %564 = vmatpush1.msra.mxu0 0.0
        %565 = vmatprep.subr.mxu0 0.0
        %566 = vmatpush1.msra.mxu0 0.0
        %567 = vmatprep.subr.mxu0 0.0
        %568 = vmatpush1.msra.mxu0 0.0
        %569 = vmatprep.subr.mxu0 0.0
        %570 = vmatpush1.msra.mxu0 0.0
        %571 = vmatprep.subr.mxu0 0.0
        %572 = vmatpush1.msra.mxu0 0.0
        %573 = vmatprep.mubr.f32.mxu0 0.0
        %v574 = vand.u32 %v198, 4294901760
        %v575 = vsub.f32 %v198, %v574
        %v576 = vand.u32 %v575, 4294901760
        %577 = vmatmul.mubr.f32.gmra.mrb[0].mxu0 %v576
        %v578 = vpop.f32.mrb[0].mxu0
        %v579 = vadd.f32 %v484, %v578
        %v580 = vpop.f32.mrb[0].mxu0
        %581 = vmatprep.mubr.f32.mxu0 0.0
        %v582 = vand.u32 %v201, 4294901760
        %v583 = vsub.f32 %v201, %v582
        %v584 = vand.u32 %v583, 4294901760
        %585 = vmatmul.mubr.f32.gmra.mrb[0].mxu0 %v584
        %v586 = vpop.f32.mrb[0].mxu0
        %v587 = vadd.f32 %v491, %v586
        %v588 = vpop.f32.mrb[0].mxu0
        %589 = vmatprep.mubr.f32.mxu0 0.0
        %v590 = vand.u32 %v204, 4294901760
        %v591 = vsub.f32 %v204, %v590
        %v592 = vand.u32 %v591, 4294901760
        %593 = vmatmul.mubr.f32.gmra.mrb[0].mxu0 %v592
        %v594 = vpop.f32.mrb[0].mxu0
        %v595 = vadd.f32 %v498, %v594
        %v596 = vpop.f32.mrb[0].mxu0
        %597 = vmatprep.mubr.f32.mxu0 0.0
        %v598 = vand.u32 %v207, 4294901760
        %v599 = vsub.f32 %v207, %v598
        %v600 = vand.u32 %v599, 4294901760
        %601 = vmatmul.mubr.f32.gmra.mrb[0].mxu0 %v600
        %v602 = vpop.f32.mrb[0].mxu0
        %v603 = vadd.f32 %v505, %v602
        %v604 = vpop.f32.mrb[0].mxu0
        %605 = vdwg.mxu0
        %606 = vmatprep.subr.mxu0 0.0
        %v607 = vand.u32 %v211, 4294901760
        %v608 = vsub.f32 %v211, %v607
        %v609 = vand.u32 %v608, 4294901760
        %610 = vmatpush1.msra.mxu0 %v609
        %611 = vmatprep.subr.mxu0 0.0
        %612 = vmatpush1.msra.mxu0 0.0
        %613 = vmatprep.subr.mxu0 0.0
        %614 = vmatpush1.msra.mxu0 0.0
        %615 = vmatprep.subr.mxu0 0.0
        %616 = vmatpush1.msra.mxu0 0.0
        %617 = vmatprep.subr.mxu0 0.0
        %618 = vmatpush1.msra.mxu0 0.0
        %619 = vmatprep.subr.mxu0 0.0
        %620 = vmatpush1.msra.mxu0 0.0
        %621 = vmatprep.subr.mxu0 0.0
        %622 = vmatpush1.msra.mxu0 0.0
        %623 = vmatprep.subr.mxu0 0.0
        %624 = vmatpush1.msra.mxu0 0.0
        %625 = vmatprep.subr.mxu0 0.0
        %626 = vmatpush1.msra.mxu0 0.0
        %627 = vmatprep.subr.mxu0 0.0
        %628 = vmatpush1.msra.mxu0 0.0
        %629 = vmatprep.subr.mxu0 0.0
        %630 = vmatpush1.msra.mxu0 0.0
        %631 = vmatprep.subr.mxu0 0.0
        %632 = vmatpush1.msra.mxu0 0.0
        %633 = vmatprep.subr.mxu0 0.0
        %634 = vmatpush1.msra.mxu0 0.0
        %635 = vmatprep.subr.mxu0 0.0
        %636 = vmatpush1.msra.mxu0 0.0
        %637 = vmatprep.subr.mxu0 0.0
        %638 = vmatpush1.msra.mxu0 0.0
        %639 = vmatprep.subr.mxu0 0.0
        %640 = vmatpush1.msra.mxu0 0.0
        %641 = vmatprep.subr.mxu0 0.0
        %642 = vmatpush1.msra.mxu0 0.0
        %643 = vmatprep.subr.mxu0 0.0
        %644 = vmatpush1.msra.mxu0 0.0
        %645 = vmatprep.subr.mxu0 0.0
        %646 = vmatpush1.msra.mxu0 0.0
        %647 = vmatprep.subr.mxu0 0.0
        %648 = vmatpush1.msra.mxu0 0.0
        %649 = vmatprep.subr.mxu0 0.0
        %650 = vmatpush1.msra.mxu0 0.0
        %651 = vmatprep.subr.mxu0 0.0
        %652 = vmatpush1.msra.mxu0 0.0
        %653 = vmatprep.subr.mxu0 0.0
        %654 = vmatpush1.msra.mxu0 0.0
        %655 = vmatprep.subr.mxu0 0.0
        %656 = vmatpush1.msra.mxu0 0.0
        %657 = vmatprep.subr.mxu0 0.0
        %658 = vmatpush1.msra.mxu0 0.0
        %659 = vmatprep.subr.mxu0 0.0
        %660 = vmatpush1.msra.mxu0 0.0
        %661 = vmatprep.subr.mxu0 0.0
        %662 = vmatpush1.msra.mxu0 0.0
        %663 = vmatprep.subr.mxu0 0.0
        %664 = vmatpush1.msra.mxu0 0.0
        %665 = vmatprep.subr.mxu0 0.0
        %666 = vmatpush1.msra.mxu0 0.0
        %667 = vmatprep.subr.mxu0 0.0
        %668 = vmatpush1.msra.mxu0 0.0
        %669 = vmatprep.subr.mxu0 0.0
        %670 = vmatpush1.msra.mxu0 0.0
        %671 = vmatprep.subr.mxu0 0.0
        %672 = vmatpush1.msra.mxu0 0.0
        %673 = vmatprep.mubr.f32.mxu0 0.0
        %v674 = vand.u32 %v198, 4294901760
        %675 = vmatmul.mubr.f32.gmra.mrb[0].mxu0 %v674
        %v676 = vpop.f32.mrb[0].mxu0
        %v677 = vadd.f32 %v579, %v676
        %v678 = vpop.f32.mrb[0].mxu0
        %679 = vmatprep.mubr.f32.mxu0 0.0
        %v680 = vand.u32 %v201, 4294901760
        %681 = vmatmul.mubr.f32.gmra.mrb[0].mxu0 %v680
        %v682 = vpop.f32.mrb[0].mxu0
        %v683 = vadd.f32 %v587, %v682
        %v684 = vpop.f32.mrb[0].mxu0
        %685 = vmatprep.mubr.f32.mxu0 0.0
        %v686 = vand.u32 %v204, 4294901760
        %687 = vmatmul.mubr.f32.gmra.mrb[0].mxu0 %v686
        %v688 = vpop.f32.mrb[0].mxu0
        %v689 = vadd.f32 %v595, %v688
        %v690 = vpop.f32.mrb[0].mxu0
        %691 = vmatprep.mubr.f32.mxu0 0.0
        %v692 = vand.u32 %v207, 4294901760
        %693 = vmatmul.mubr.f32.gmra.mrb[0].mxu0 %v692
        %v694 = vpop.f32.mrb[0].mxu0
        %v695 = vadd.f32 %v603, %v694
        %v696 = vpop.f32.mrb[0].mxu0
        %697 = vdwg.mxu0
        %698 = vmatprep.subr.mxu0 0.0
        %v699 = vand.u32 %v211, 4294901760
        %700 = vmatpush1.msra.mxu0 %v699
        %701 = vmatprep.subr.mxu0 0.0
        %702 = vmatpush1.msra.mxu0 0.0
        %703 = vmatprep.subr.mxu0 0.0
        %704 = vmatpush1.msra.mxu0 0.0
        %705 = vmatprep.subr.mxu0 0.0
        %706 = vmatpush1.msra.mxu0 0.0
        %707 = vmatprep.subr.mxu0 0.0
        %708 = vmatpush1.msra.mxu0 0.0
        %709 = vmatprep.subr.mxu0 0.0
        %710 = vmatpush1.msra.mxu0 0.0
        %711 = vmatprep.subr.mxu0 0.0
        %712 = vmatpush1.msra.mxu0 0.0
        %713 = vmatprep.subr.mxu0 0.0
        %714 = vmatpush1.msra.mxu0 0.0
        %715 = vmatprep.subr.mxu0 0.0
        %716 = vmatpush1.msra.mxu0 0.0
        %717 = vmatprep.subr.mxu0 0.0
        %718 = vmatpush1.msra.mxu0 0.0
        %719 = vmatprep.subr.mxu0 0.0
        %720 = vmatpush1.msra.mxu0 0.0
        %721 = vmatprep.subr.mxu0 0.0
        %722 = vmatpush1.msra.mxu0 0.0
        %723 = vmatprep.subr.mxu0 0.0
        %724 = vmatpush1.msra.mxu0 0.0
        %725 = vmatprep.subr.mxu0 0.0
        %726 = vmatpush1.msra.mxu0 0.0
        %727 = vmatprep.subr.mxu0 0.0
        %728 = vmatpush1.msra.mxu0 0.0
        %729 = vmatprep.subr.mxu0 0.0
        %730 = vmatpush1.msra.mxu0 0.0
        %731 = vmatprep.subr.mxu0 0.0
        %732 = vmatpush1.msra.mxu0 0.0
        %733 = vmatprep.subr.mxu0 0.0
        %734 = vmatpush1.msra.mxu0 0.0
        %735 = vmatprep.subr.mxu0 0.0
        %736 = vmatpush1.msra.mxu0 0.0
        %737 = vmatprep.subr.mxu0 0.0
        %738 = vmatpush1.msra.mxu0 0.0
        %739 = vmatprep.subr.mxu0 0.0
        %740 = vmatpush1.msra.mxu0 0.0
        %741 = vmatprep.subr.mxu0 0.0
        %742 = vmatpush1.msra.mxu0 0.0
        %743 = vmatprep.subr.mxu0 0.0
        %744 = vmatpush1.msra.mxu0 0.0
        %745 = vmatprep.subr.mxu0 0.0
        %746 = vmatpush1.msra.mxu0 0.0
        %747 = vmatprep.subr.mxu0 0.0
        %748 = vmatpush1.msra.mxu0 0.0
        %749 = vmatprep.subr.mxu0 0.0
        %750 = vmatpush1.msra.mxu0 0.0
        %751 = vmatprep.subr.mxu0 0.0
        %752 = vmatpush1.msra.mxu0 0.0
        %753 = vmatprep.subr.mxu0 0.0
        %754 = vmatpush1.msra.mxu0 0.0
        %755 = vmatprep.subr.mxu0 0.0
        %756 = vmatpush1.msra.mxu0 0.0
        %757 = vmatprep.subr.mxu0 0.0
        %758 = vmatpush1.msra.mxu0 0.0
        %759 = vmatprep.subr.mxu0 0.0
        %760 = vmatpush1.msra.mxu0 0.0
        %761 = vmatprep.subr.mxu0 0.0
        %762 = vmatpush1.msra.mxu0 0.0
        %763 = vmatprep.mubr.f32.mxu0 0.0
        %v764 = vand.u32 %v198, 4294901760
        %765 = vmatmul.mubr.f32.gmra.mrb[0].mxu0 %v764
        %v766 = vpop.f32.mrb[0].mxu0
        %v767 = vadd.f32 %v677, %v766
        %v768 = vpop.f32.mrb[0].mxu0
        %769 = vmatprep.mubr.f32.mxu0 0.0
        %v770 = vand.u32 %v201, 4294901760
        %771 = vmatmul.mubr.f32.gmra.mrb[0].mxu0 %v770
        %v772 = vpop.f32.mrb[0].mxu0
        %v773 = vadd.f32 %v683, %v772
        %v774 = vpop.f32.mrb[0].mxu0
        %775 = vmatprep.mubr.f32.mxu0 0.0
        %v776 = vand.u32 %v204, 4294901760
        %777 = vmatmul.mubr.f32.gmra.mrb[0].mxu0 %v776
        %v778 = vpop.f32.mrb[0].mxu0
        %v779 = vadd.f32 %v689, %v778
        %v780 = vpop.f32.mrb[0].mxu0
        %781 = vmatprep.mubr.f32.mxu0 0.0
        %v782 = vand.u32 %v207, 4294901760
        %783 = vmatmul.mubr.f32.gmra.mrb[0].mxu0 %v782
        %v784 = vpop.f32.mrb[0].mxu0
        %v785 = vadd.f32 %v695, %v784
        %v786 = vpop.f32.mrb[0].mxu0
        %787 = vdwg.mxu0
        %v788 = vmax.f32 %v767, 0.0
        %v789 = vmax.f32 %v773, 0.0
        %v790 = vmax.f32 %v779, 0.0
        %v791 = vmax.f32 %v785, 0.0
        %v792 = vld [vmem:[%s1] sm:$0xff]
        %vm793 = vcmask 261120
        %v795 = vsel %vm793, %v792, 0
        %797 = vmatprep.subr.mxu0 0.0
        %v798 = vand.u32 %v788, 4294901760
        %799 = vmatpush1.msra.mxu0 %v798
        %800 = vmatprep.subr.mxu0 0.0
        %v801 = vand.u32 %v789, 4294901760
        %802 = vmatpush1.msra.mxu0 %v801
        %803 = vmatprep.subr.mxu0 0.0
        %v804 = vand.u32 %v790, 4294901760
        %805 = vmatpush1.msra.mxu0 %v804
        %806 = vmatprep.subr.mxu0 0.0
        %v807 = vand.u32 %v791, 4294901760
        %808 = vmatpush1.msra.mxu0 %v807
        %809 = vmatprep.subr.mxu0 0.0
        %810 = vmatpush1.msra.mxu0 0.0
        %811 = vmatprep.subr.mxu0 0.0
        %812 = vmatpush1.msra.mxu0 0.0
        %813 = vmatprep.subr.mxu0 0.0
        %814 = vmatpush1.msra.mxu0 0.0
        %815 = vmatprep.subr.mxu0 0.0
        %816 = vmatpush1.msra.mxu0 0.0
        %817 = vmatprep.subr.mxu0 0.0
        %818 = vmatpush1.msra.mxu0 0.0
        %819 = vmatprep.subr.mxu0 0.0
        %820 = vmatpush1.msra.mxu0 0.0
        %821 = vmatprep.subr.mxu0 0.0
        %822 = vmatpush1.msra.mxu0 0.0
        %823 = vmatprep.subr.mxu0 0.0
        %824 = vmatpush1.msra.mxu0 0.0
        %825 = vmatprep.subr.mxu0 0.0
        %826 = vmatpush1.msra.mxu0 0.0
        %827 = vmatprep.subr.mxu0 0.0
        %828 = vmatpush1.msra.mxu0 0.0
        %829 = vmatprep.subr.mxu0 0.0
        %830 = vmatpush1.msra.mxu0 0.0
        %831 = vmatprep.subr.mxu0 0.0
        %832 = vmatpush1.msra.mxu0 0.0
        %833 = vmatprep.subr.mxu0 0.0
        %834 = vmatpush1.msra.mxu0 0.0
        %835 = vmatprep.subr.mxu0 0.0
        %836 = vmatpush1.msra.mxu0 0.0
        %837 = vmatprep.subr.mxu0 0.0
        %838 = vmatpush1.msra.mxu0 0.0
        %839 = vmatprep.subr.mxu0 0.0
        %840 = vmatpush1.msra.mxu0 0.0
        %841 = vmatprep.subr.mxu0 0.0
        %842 = vmatpush1.msra.mxu0 0.0
        %843 = vmatprep.subr.mxu0 0.0
        %844 = vmatpush1.msra.mxu0 0.0
        %845 = vmatprep.subr.mxu0 0.0
        %846 = vmatpush1.msra.mxu0 0.0
        %847 = vmatprep.subr.mxu0 0.0
        %848 = vmatpush1.msra.mxu0 0.0
        %849 = vmatprep.subr.mxu0 0.0
        %850 = vmatpush1.msra.mxu0 0.0
        %851 = vmatprep.subr.mxu0 0.0
        %852 = vmatpush1.msra.mxu0 0.0
        %853 = vmatprep.subr.mxu0 0.0
        %854 = vmatpush1.msra.mxu0 0.0
        %855 = vmatprep.subr.mxu0 0.0
        %856 = vmatpush1.msra.mxu0 0.0
        %857 = vmatprep.subr.mxu0 0.0
        %858 = vmatpush1.msra.mxu0 0.0
        %859 = vmatprep.subr.mxu0 0.0
        %860 = vmatpush1.msra.mxu0 0.0
        %861 = vmatprep.subr.mxu0 0.0
        %862 = vmatpush1.msra.mxu0 0.0
        %863 = vmatprep.subr.mxu0 0.0
        %864 = vmatpush1.msra.mxu0 0.0
        %865 = vmatprep.mubr.f32.mxu0 0.0
        %v866 = vand.u32 %v795, 4294901760
        %v867 = vsub.f32 %v795, %v866
        %v868 = vand.u32 %v867, 4294901760
        %v869 = vsub.f32 %v867, %v868
        %v870 = vand.u32 %v869, 4294901760
        %871 = vmatmul.mubr.f32.gmra.mrb[0].mxu0 %v870
        %v872 = vpop.f32.mrb[0].mxu0
        %v873 = vadd.f32 0.0, %v872
        %v874 = vpop.f32.mrb[0].mxu0
        %875 = vdwg.mxu0
        %876 = vmatprep.subr.mxu0 0.0
        %v877 = vand.u32 %v788, 4294901760
        %v878 = vsub.f32 %v788, %v877
        %v879 = vand.u32 %v878, 4294901760
        %v880 = vsub.f32 %v878, %v879
        %v881 = vand.u32 %v880, 4294901760
        %882 = vmatpush1.msra.mxu0 %v881
        %883 = vmatprep.subr.mxu0 0.0
        %v884 = vand.u32 %v789, 4294901760
        %v885 = vsub.f32 %v789, %v884
        %v886 = vand.u32 %v885, 4294901760
        %v887 = vsub.f32 %v885, %v886
        %v888 = vand.u32 %v887, 4294901760
        %889 = vmatpush1.msra.mxu0 %v888
        %890 = vmatprep.subr.mxu0 0.0
        %v891 = vand.u32 %v790, 4294901760
        %v892 = vsub.f32 %v790, %v891
        %v893 = vand.u32 %v892, 4294901760
        %v894 = vsub.f32 %v892, %v893
        %v895 = vand.u32 %v894, 4294901760
        %896 = vmatpush1.msra.mxu0 %v895
        %897 = vmatprep.subr.mxu0 0.0
        %v898 = vand.u32 %v791, 4294901760
        %v899 = vsub.f32 %v791, %v898
        %v900 = vand.u32 %v899, 4294901760
        %v901 = vsub.f32 %v899, %v900
        %v902 = vand.u32 %v901, 4294901760
        %903 = vmatpush1.msra.mxu0 %v902
        %904 = vmatprep.subr.mxu0 0.0
        %905 = vmatpush1.msra.mxu0 0.0
        %906 = vmatprep.subr.mxu0 0.0
        %907 = vmatpush1.msra.mxu0 0.0
        %908 = vmatprep.subr.mxu0 0.0
        %909 = vmatpush1.msra.mxu0 0.0
        %910 = vmatprep.subr.mxu0 0.0
        %911 = vmatpush1.msra.mxu0 0.0
        %912 = vmatprep.subr.mxu0 0.0
        %913 = vmatpush1.msra.mxu0 0.0
        %914 = vmatprep.subr.mxu0 0.0
        %915 = vmatpush1.msra.mxu0 0.0
        %916 = vmatprep.subr.mxu0 0.0
        %917 = vmatpush1.msra.mxu0 0.0
        %918 = vmatprep.subr.mxu0 0.0
        %919 = vmatpush1.msra.mxu0 0.0
        %920 = vmatprep.subr.mxu0 0.0
        %921 = vmatpush1.msra.mxu0 0.0
        %922 = vmatprep.subr.mxu0 0.0
        %923 = vmatpush1.msra.mxu0 0.0
        %924 = vmatprep.subr.mxu0 0.0
        %925 = vmatpush1.msra.mxu0 0.0
        %926 = vmatprep.subr.mxu0 0.0
        %927 = vmatpush1.msra.mxu0 0.0
        %928 = vmatprep.subr.mxu0 0.0
        %929 = vmatpush1.msra.mxu0 0.0
        %930 = vmatprep.subr.mxu0 0.0
        %931 = vmatpush1.msra.mxu0 0.0
        %932 = vmatprep.subr.mxu0 0.0
        %933 = vmatpush1.msra.mxu0 0.0
        %934 = vmatprep.subr.mxu0 0.0
        %935 = vmatpush1.msra.mxu0 0.0
        %936 = vmatprep.subr.mxu0 0.0
        %937 = vmatpush1.msra.mxu0 0.0
        %938 = vmatprep.subr.mxu0 0.0
        %939 = vmatpush1.msra.mxu0 0.0
        %940 = vmatprep.subr.mxu0 0.0
        %941 = vmatpush1.msra.mxu0 0.0
        %942 = vmatprep.subr.mxu0 0.0
        %943 = vmatpush1.msra.mxu0 0.0
        %944 = vmatprep.subr.mxu0 0.0
        %945 = vmatpush1.msra.mxu0 0.0
        %946 = vmatprep.subr.mxu0 0.0
        %947 = vmatpush1.msra.mxu0 0.0
        %948 = vmatprep.subr.mxu0 0.0
        %949 = vmatpush1.msra.mxu0 0.0
        %950 = vmatprep.subr.mxu0 0.0
        %951 = vmatpush1.msra.mxu0 0.0
        %952 = vmatprep.subr.mxu0 0.0
        %953 = vmatpush1.msra.mxu0 0.0
        %954 = vmatprep.subr.mxu0 0.0
        %955 = vmatpush1.msra.mxu0 0.0
        %956 = vmatprep.subr.mxu0 0.0
        %957 = vmatpush1.msra.mxu0 0.0
        %958 = vmatprep.subr.mxu0 0.0
        %959 = vmatpush1.msra.mxu0 0.0
        %960 = vmatprep.mubr.f32.mxu0 0.0
        %v961 = vand.u32 %v795, 4294901760
        %962 = vmatmul.mubr.f32.gmra.mrb[0].mxu0 %v961
        %v963 = vpop.f32.mrb[0].mxu0
        %v964 = vadd.f32 %v873, %v963
        %v965 = vpop.f32.mrb[0].mxu0
        %966 = vdwg.mxu0
        %967 = vmatprep.subr.mxu0 0.0
        %v968 = vand.u32 %v788, 4294901760
        %v969 = vsub.f32 %v788, %v968
        %970 = vmatpush1.msra.mxu0 %v969
        %971 = vmatprep.subr.mxu0 0.0
        %v972 = vand.u32 %v789, 4294901760
        %v973 = vsub.f32 %v789, %v972
        %974 = vmatpush1.msra.mxu0 %v973
        %975 = vmatprep.subr.mxu0 0.0
        %v976 = vand.u32 %v790, 4294901760
        %v977 = vsub.f32 %v790, %v976
        %978 = vmatpush1.msra.mxu0 %v977
        %979 = vmatprep.subr.mxu0 0.0
        %v980 = vand.u32 %v791, 4294901760
        %v981 = vsub.f32 %v791, %v980
        %982 = vmatpush1.msra.mxu0 %v981
        %983 = vmatprep.subr.mxu0 0.0
        %984 = vmatpush1.msra.mxu0 0.0
        %985 = vmatprep.subr.mxu0 0.0
        %986 = vmatpush1.msra.mxu0 0.0
        %987 = vmatprep.subr.mxu0 0.0
        %988 = vmatpush1.msra.mxu0 0.0
        %989 = vmatprep.subr.mxu0 0.0
        %990 = vmatpush1.msra.mxu0 0.0
        %991 = vmatprep.subr.mxu0 0.0
        %992 = vmatpush1.msra.mxu0 0.0
        %993 = vmatprep.subr.mxu0 0.0
        %994 = vmatpush1.msra.mxu0 0.0
        %995 = vmatprep.subr.mxu0 0.0
        %996 = vmatpush1.msra.mxu0 0.0
        %997 = vmatprep.subr.mxu0 0.0
        %998 = vmatpush1.msra.mxu0 0.0
        %999 = vmatprep.subr.mxu0 0.0
        %1000 = vmatpush1.msra.mxu0 0.0
        %1001 = vmatprep.subr.mxu0 0.0
        %1002 = vmatpush1.msra.mxu0 0.0
        %1003 = vmatprep.subr.mxu0 0.0
        %1004 = vmatpush1.msra.mxu0 0.0
        %1005 = vmatprep.subr.mxu0 0.0
        %1006 = vmatpush1.msra.mxu0 0.0
        %1007 = vmatprep.subr.mxu0 0.0
        %1008 = vmatpush1.msra.mxu0 0.0
        %1009 = vmatprep.subr.mxu0 0.0
        %1010 = vmatpush1.msra.mxu0 0.0
        %1011 = vmatprep.subr.mxu0 0.0
        %1012 = vmatpush1.msra.mxu0 0.0
        %1013 = vmatprep.subr.mxu0 0.0
        %1014 = vmatpush1.msra.mxu0 0.0
        %1015 = vmatprep.subr.mxu0 0.0
        %1016 = vmatpush1.msra.mxu0 0.0
        %1017 = vmatprep.subr.mxu0 0.0
        %1018 = vmatpush1.msra.mxu0 0.0
        %1019 = vmatprep.subr.mxu0 0.0
        %1020 = vmatpush1.msra.mxu0 0.0
        %1021 = vmatprep.subr.mxu0 0.0
        %1022 = vmatpush1.msra.mxu0 0.0
        %1023 = vmatprep.subr.mxu0 0.0
        %1024 = vmatpush1.msra.mxu0 0.0
        %1025 = vmatprep.subr.mxu0 0.0
        %1026 = vmatpush1.msra.mxu0 0.0
        %1027 = vmatprep.subr.mxu0 0.0
        %1028 = vmatpush1.msra.mxu0 0.0
        %1029 = vmatprep.subr.mxu0 0.0
        %1030 = vmatpush1.msra.mxu0 0.0
        %1031 = vmatprep.subr.mxu0 0.0
        %1032 = vmatpush1.msra.mxu0 0.0
        %1033 = vmatprep.subr.mxu0 0.0
        %1034 = vmatpush1.msra.mxu0 0.0
        %1035 = vmatprep.subr.mxu0 0.0
        %1036 = vmatpush1.msra.mxu0 0.0
        %1037 = vmatprep.subr.mxu0 0.0
        %1038 = vmatpush1.msra.mxu0 0.0
        %1039 = vmatprep.mubr.f32.mxu0 0.0
        %v1040 = vand.u32 %v795, 4294901760
        %v1041 = vsub.f32 %v795, %v1040
        %1042 = vmatmul.mubr.f32.gmra.mrb[0].mxu0 %v1041
        %v1043 = vpop.f32.mrb[0].mxu0
        %v1044 = vadd.f32 %v964, %v1043
        %v1045 = vpop.f32.mrb[0].mxu0
        %1046 = vdwg.mxu0
        %1047 = vmatprep.subr.mxu0 0.0
        %v1048 = vand.u32 %v788, 4294901760
        %1049 = vmatpush1.msra.mxu0 %v1048
        %1050 = vmatprep.subr.mxu0 0.0
        %v1051 = vand.u32 %v789, 4294901760
        %1052 = vmatpush1.msra.mxu0 %v1051
        %1053 = vmatprep.subr.mxu0 0.0
        %v1054 = vand.u32 %v790, 4294901760
        %1055 = vmatpush1.msra.mxu0 %v1054
        %1056 = vmatprep.subr.mxu0 0.0
        %v1057 = vand.u32 %v791, 4294901760
        %1058 = vmatpush1.msra.mxu0 %v1057
        %1059 = vmatprep.subr.mxu0 0.0
        %1060 = vmatpush1.msra.mxu0 0.0
        %1061 = vmatprep.subr.mxu0 0.0
        %1062 = vmatpush1.msra.mxu0 0.0
        %1063 = vmatprep.subr.mxu0 0.0
        %1064 = vmatpush1.msra.mxu0 0.0
        %1065 = vmatprep.subr.mxu0 0.0
        %1066 = vmatpush1.msra.mxu0 0.0
        %1067 = vmatprep.subr.mxu0 0.0
        %1068 = vmatpush1.msra.mxu0 0.0
        %1069 = vmatprep.subr.mxu0 0.0
        %1070 = vmatpush1.msra.mxu0 0.0
        %1071 = vmatprep.subr.mxu0 0.0
        %1072 = vmatpush1.msra.mxu0 0.0
        %1073 = vmatprep.subr.mxu0 0.0
        %1074 = vmatpush1.msra.mxu0 0.0
        %1075 = vmatprep.subr.mxu0 0.0
        %1076 = vmatpush1.msra.mxu0 0.0
        %1077 = vmatprep.subr.mxu0 0.0
        %1078 = vmatpush1.msra.mxu0 0.0
        %1079 = vmatprep.subr.mxu0 0.0
        %1080 = vmatpush1.msra.mxu0 0.0
        %1081 = vmatprep.subr.mxu0 0.0
        %1082 = vmatpush1.msra.mxu0 0.0
        %1083 = vmatprep.subr.mxu0 0.0
        %1084 = vmatpush1.msra.mxu0 0.0
        %1085 = vmatprep.subr.mxu0 0.0
        %1086 = vmatpush1.msra.mxu0 0.0
        %1087 = vmatprep.subr.mxu0 0.0
        %1088 = vmatpush1.msra.mxu0 0.0
        %1089 = vmatprep.subr.mxu0 0.0
        %1090 = vmatpush1.msra.mxu0 0.0
        %1091 = vmatprep.subr.mxu0 0.0
        %1092 = vmatpush1.msra.mxu0 0.0
        %1093 = vmatprep.subr.mxu0 0.0
        %1094 = vmatpush1.msra.mxu0 0.0
        %1095 = vmatprep.subr.mxu0 0.0
        %1096 = vmatpush1.msra.mxu0 0.0
        %1097 = vmatprep.subr.mxu0 0.0
        %1098 = vmatpush1.msra.mxu0 0.0
        %1099 = vmatprep.subr.mxu0 0.0
        %1100 = vmatpush1.msra.mxu0 0.0
        %1101 = vmatprep.subr.mxu0 0.0
        %1102 = vmatpush1.msra.mxu0 0.0
        %1103 = vmatprep.subr.mxu0 0.0
        %1104 = vmatpush1.msra.mxu0 0.0
        %1105 = vmatprep.subr.mxu0 0.0
        %1106 = vmatpush1.msra.mxu0 0.0
        %1107 = vmatprep.subr.mxu0 0.0
        %1108 = vmatpush1.msra.mxu0 0.0
        %1109 = vmatprep.subr.mxu0 0.0
        %1110 = vmatpush1.msra.mxu0 0.0
        %1111 = vmatprep.subr.mxu0 0.0
        %1112 = vmatpush1.msra.mxu0 0.0
        %1113 = vmatprep.subr.mxu0 0.0
        %1114 = vmatpush1.msra.mxu0 0.0
        %1115 = vmatprep.mubr.f32.mxu0 0.0
        %v1116 = vand.u32 %v795, 4294901760
        %v1117 = vsub.f32 %v795, %v1116
        %v1118 = vand.u32 %v1117, 4294901760
        %1119 = vmatmul.mubr.f32.gmra.mrb[0].mxu0 %v1118
        %v1120 = vpop.f32.mrb[0].mxu0
        %v1121 = vadd.f32 %v1044, %v1120
        %v1122 = vpop.f32.mrb[0].mxu0
        %1123 = vdwg.mxu0
        %1124 = vmatprep.subr.mxu0 0.0
        %v1125 = vand.u32 %v788, 4294901760
        %v1126 = vsub.f32 %v788, %v1125
        %v1127 = vand.u32 %v1126, 4294901760
        %1128 = vmatpush1.msra.mxu0 %v1127
        %1129 = vmatprep.subr.mxu0 0.0
        %v1130 = vand.u32 %v789, 4294901760
        %v1131 = vsub.f32 %v789, %v1130
        %v1132 = vand.u32 %v1131, 4294901760
        %1133 = vmatpush1.msra.mxu0 %v1132
        %1134 = vmatprep.subr.mxu0 0.0
        %v1135 = vand.u32 %v790, 4294901760
        %v1136 = vsub.f32 %v790, %v1135
        %v1137 = vand.u32 %v1136, 4294901760
        %1138 = vmatpush1.msra.mxu0 %v1137
        %1139 = vmatprep.subr.mxu0 0.0
        %v1140 = vand.u32 %v791, 4294901760
        %v1141 = vsub.f32 %v791, %v1140
        %v1142 = vand.u32 %v1141, 4294901760
        %1143 = vmatpush1.msra.mxu0 %v1142
        %1144 = vmatprep.subr.mxu0 0.0
        %1145 = vmatpush1.msra.mxu0 0.0
        %1146 = vmatprep.subr.mxu0 0.0
        %1147 = vmatpush1.msra.mxu0 0.0
        %1148 = vmatprep.subr.mxu0 0.0
        %1149 = vmatpush1.msra.mxu0 0.0
        %1150 = vmatprep.subr.mxu0 0.0
        %1151 = vmatpush1.msra.mxu0 0.0
        %1152 = vmatprep.subr.mxu0 0.0
        %1153 = vmatpush1.msra.mxu0 0.0
        %1154 = vmatprep.subr.mxu0 0.0
        %1155 = vmatpush1.msra.mxu0 0.0
        %1156 = vmatprep.subr.mxu0 0.0
        %1157 = vmatpush1.msra.mxu0 0.0
        %1158 = vmatprep.subr.mxu0 0.0
        %1159 = vmatpush1.msra.mxu0 0.0
        %1160 = vmatprep.subr.mxu0 0.0
        %1161 = vmatpush1.msra.mxu0 0.0
        %1162 = vmatprep.subr.mxu0 0.0
        %1163 = vmatpush1.msra.mxu0 0.0
        %1164 = vmatprep.subr.mxu0 0.0
        %1165 = vmatpush1.msra.mxu0 0.0
        %1166 = vmatprep.subr.mxu0 0.0
        %1167 = vmatpush1.msra.mxu0 0.0
        %1168 = vmatprep.subr.mxu0 0.0
        %1169 = vmatpush1.msra.mxu0 0.0
        %1170 = vmatprep.subr.mxu0 0.0
        %1171 = vmatpush1.msra.mxu0 0.0
        %1172 = vmatprep.subr.mxu0 0.0
        %1173 = vmatpush1.msra.mxu0 0.0
        %1174 = vmatprep.subr.mxu0 0.0
        %1175 = vmatpush1.msra.mxu0 0.0
        %1176 = vmatprep.subr.mxu0 0.0
        %1177 = vmatpush1.msra.mxu0 0.0
        %1178 = vmatprep.subr.mxu0 0.0
        %1179 = vmatpush1.msra.mxu0 0.0
        %1180 = vmatprep.subr.mxu0 0.0
        %1181 = vmatpush1.msra.mxu0 0.0
        %1182 = vmatprep.subr.mxu0 0.0
        %1183 = vmatpush1.msra.mxu0 0.0
        %1184 = vmatprep.subr.mxu0 0.0
        %1185 = vmatpush1.msra.mxu0 0.0
        %1186 = vmatprep.subr.mxu0 0.0
        %1187 = vmatpush1.msra.mxu0 0.0
        %1188 = vmatprep.subr.mxu0 0.0
        %1189 = vmatpush1.msra.mxu0 0.0
        %1190 = vmatprep.subr.mxu0 0.0
        %1191 = vmatpush1.msra.mxu0 0.0
        %1192 = vmatprep.subr.mxu0 0.0
        %1193 = vmatpush1.msra.mxu0 0.0
        %1194 = vmatprep.subr.mxu0 0.0
        %1195 = vmatpush1.msra.mxu0 0.0
        %1196 = vmatprep.subr.mxu0 0.0
        %1197 = vmatpush1.msra.mxu0 0.0
        %1198 = vmatprep.subr.mxu0 0.0
        %1199 = vmatpush1.msra.mxu0 0.0
        %1200 = vmatprep.mubr.f32.mxu0 0.0
        %v1201 = vand.u32 %v795, 4294901760
        %1202 = vmatmul.mubr.f32.gmra.mrb[0].mxu0 %v1201
        %v1203 = vpop.f32.mrb[0].mxu0
        %v1204 = vadd.f32 %v1121, %v1203
        %v1205 = vpop.f32.mrb[0].mxu0
        %1206 = vdwg.mxu0
        %1207 = vmatprep.subr.mxu0 0.0
        %v1208 = vand.u32 %v788, 4294901760
        %1209 = vmatpush1.msra.mxu0 %v1208
        %1210 = vmatprep.subr.mxu0 0.0
        %v1211 = vand.u32 %v789, 4294901760
        %1212 = vmatpush1.msra.mxu0 %v1211
        %1213 = vmatprep.subr.mxu0 0.0
        %v1214 = vand.u32 %v790, 4294901760
        %1215 = vmatpush1.msra.mxu0 %v1214
        %1216 = vmatprep.subr.mxu0 0.0
        %v1217 = vand.u32 %v791, 4294901760
        %1218 = vmatpush1.msra.mxu0 %v1217
        %1219 = vmatprep.subr.mxu0 0.0
        %1220 = vmatpush1.msra.mxu0 0.0
        %1221 = vmatprep.subr.mxu0 0.0
        %1222 = vmatpush1.msra.mxu0 0.0
        %1223 = vmatprep.subr.mxu0 0.0
        %1224 = vmatpush1.msra.mxu0 0.0
        %1225 = vmatprep.subr.mxu0 0.0
        %1226 = vmatpush1.msra.mxu0 0.0
        %1227 = vmatprep.subr.mxu0 0.0
        %1228 = vmatpush1.msra.mxu0 0.0
        %1229 = vmatprep.subr.mxu0 0.0
        %1230 = vmatpush1.msra.mxu0 0.0
        %1231 = vmatprep.subr.mxu0 0.0
        %1232 = vmatpush1.msra.mxu0 0.0
        %1233 = vmatprep.subr.mxu0 0.0
        %1234 = vmatpush1.msra.mxu0 0.0
        %1235 = vmatprep.subr.mxu0 0.0
        %1236 = vmatpush1.msra.mxu0 0.0
        %1237 = vmatprep.subr.mxu0 0.0
        %1238 = vmatpush1.msra.mxu0 0.0
        %1239 = vmatprep.subr.mxu0 0.0
        %1240 = vmatpush1.msra.mxu0 0.0
        %1241 = vmatprep.subr.mxu0 0.0
        %1242 = vmatpush1.msra.mxu0 0.0
        %1243 = vmatprep.subr.mxu0 0.0
        %1244 = vmatpush1.msra.mxu0 0.0
        %1245 = vmatprep.subr.mxu0 0.0
        %1246 = vmatpush1.msra.mxu0 0.0
        %1247 = vmatprep.subr.mxu0 0.0
        %1248 = vmatpush1.msra.mxu0 0.0
        %1249 = vmatprep.subr.mxu0 0.0
        %1250 = vmatpush1.msra.mxu0 0.0
        %1251 = vmatprep.subr.mxu0 0.0
        %1252 = vmatpush1.msra.mxu0 0.0
        %1253 = vmatprep.subr.mxu0 0.0
        %1254 = vmatpush1.msra.mxu0 0.0
        %1255 = vmatprep.subr.mxu0 0.0
        %1256 = vmatpush1.msra.mxu0 0.0
        %1257 = vmatprep.subr.mxu0 0.0
        %1258 = vmatpush1.msra.mxu0 0.0
        %1259 = vmatprep.subr.mxu0 0.0
        %1260 = vmatpush1.msra.mxu0 0.0
        %1261 = vmatprep.subr.mxu0 0.0
        %1262 = vmatpush1.msra.mxu0 0.0
        %1263 = vmatprep.subr.mxu0 0.0
        %1264 = vmatpush1.msra.mxu0 0.0
        %1265 = vmatprep.subr.mxu0 0.0
        %1266 = vmatpush1.msra.mxu0 0.0
        %1267 = vmatprep.subr.mxu0 0.0
        %1268 = vmatpush1.msra.mxu0 0.0
        %1269 = vmatprep.subr.mxu0 0.0
        %1270 = vmatpush1.msra.mxu0 0.0
        %1271 = vmatprep.subr.mxu0 0.0
        %1272 = vmatpush1.msra.mxu0 0.0
        %1273 = vmatprep.subr.mxu0 0.0
        %1274 = vmatpush1.msra.mxu0 0.0
        %1275 = vmatprep.mubr.f32.mxu0 0.0
        %v1276 = vand.u32 %v795, 4294901760
        %1277 = vmatmul.mubr.f32.gmra.mrb[0].mxu0 %v1276
        %v1278 = vpop.f32.mrb[0].mxu0
        %v1279 = vadd.f32 %v1204, %v1278
        %v1280 = vpop.f32.mrb[0].mxu0
        %1281 = vdwg.mxu0
        %vm1282 = vcmask 523264
        %1283 = vst.msk [vmem:[%s183] sm:$0xff] %vm1282, %v1279
        %s1284 = sand.u32 %s109, 1
        %s1285 = scalar_lea.sflag [#allocation3], %s1284
        %s1286 = sand.u32 %s109, 1
        %s1287 = smul.addr %s1286, 8
        %s1288 = scalar_lea.vmem [#allocation2], %s1287
        // Predicated region
        $region33: #{tpu_custom_call.1} parent=31 // pred_check
          %p1289 = pneg %p119
        $region34: #{tpu_custom_call.1} parent=31 // pred_check_branch
          %1291 = sbr.rel (%p1289) target = $region36
        $region35: #{tpu_custom_call.1} parent=31 // pred_region
          %s1293 = ssub.s32 128, 128
          %1294 = vsyncadd %s1285, %s1293
          %s1295 = sadd.s32 %s22, %s21
          %s1296 = smul.addr %s1295, 128
          %s1297 = scalar_lea.hbm %s3, %s1296
          %s1299 = sshll.u32 %s1288, 4
          %s1300 = int_to_ptr.vmem [resolvable:$true] %s1299
          %1302 = dma.vmem_to_hbm [thread:$0]  %s1300, 128, %s1297, %s1285
        $region36: #{tpu_custom_call.1} parent=31 // pred_fallthru
          _
      $region32: #{tpu_custom_call.1} parent=5 // pred_fallthru
        _
      %p1303 = scmp.le.s32.totalorder 2, %s12
      // Predicated region
      $region37: #{tpu_custom_call.1} parent=5 // pred_check
        %p1304 = pneg %p1303
      $region38: #{tpu_custom_call.1} parent=5 // pred_check_branch
        %1306 = sbr.rel (%p1304) target = $region40
      $region39: #{tpu_custom_call.1} parent=5 // pred_region
        %s1307 = ssub.s32 %s12, 2
        // Predicated region
        $region41: #{tpu_custom_call.1} parent=39 // pred_check
          %p1308 = pneg %p125
        $region42: #{tpu_custom_call.1} parent=39 // pred_check_branch
          %1310 = sbr.rel (%p1308) target = $region44
        $region43: #{tpu_custom_call.1} parent=39 // pred_region
          %s1311 = sand.u32 %s110, 1
          %s1312 = scalar_lea.sflag [#allocation3], %s1311
          %s1313 = sand.u32 %s110, 1
          %s1314 = smul.addr %s1313, 8
          %s1315 = scalar_lea.vmem [#allocation2], %s1314
          %1316 = dma.done %s1312, 128
        $region44: #{tpu_custom_call.1} parent=39 // pred_fallthru
          _
      $region40: #{tpu_custom_call.1} parent=5 // pred_fallthru
        _
    $region6: #{tpu_custom_call.1} parent=1 // loop_footer
      %s16 = sadd.s32 1, %s12
    $region7: #{tpu_custom_call.1} parent=1 // loop_footer_branch
      %11 = sbr.rel target = $region3
    $region8: #{tpu_custom_call.1} parent=1 // loop_exit
      _
    %1317 = vsyncpa [#allocation3], 1
    %s1318 = scalar_lea.sflag [#allocation3], 1
    %1319 = vsyncpa %s1318, 1

</llo_original>
